<compile_context>
chip_gen: v6e
topology: v6e:2x2x1
jax: 0.10.0
libtpu: 0.0.40
codegen_flags: <defaults>
</compile_context>

<pallas_src>
import functools

import jax
import jax.numpy as jnp
from jax.experimental import pallas as pl
from jax.experimental.pallas import tpu as pltpu

LOG_STD_MIN = -20.0
LOG_STD_MAX = 2.0

LANE = 128
MAX_TB = 8192  # batch-tile cap; ~1.5 MiB double-buffered VMEM, fits all gens


def _round_up(x, m):
    return ((x + m - 1) // m) * m


def actor_forward_kernel(x_ref, w1_ref, b1_ref, w2_ref, b2_ref,
                         wh_ref, bh_ref, out_ref, *, action_dim):
    # fc1 + relu  (bf16 operands on the MXU, f32 accumulate, f32 elementwise)
    xt = x_ref[...].astype(jnp.bfloat16)                       # (Fp, TB)
    h1 = jnp.dot(w1_ref[...], xt,
                 preferred_element_type=jnp.float32) + b1_ref[...]
    h1 = jnp.maximum(h1, 0.0)                                   # (H, TB)

    # fc2 + relu
    h2 = jnp.dot(w2_ref[...], h1.astype(jnp.bfloat16),
                 preferred_element_type=jnp.float32) + b2_ref[...]
    h2 = jnp.maximum(h2, 0.0)                                   # (H, TB)

    # fused mean|logstd head: single matmul, lane-dense (sublane=2A_pad) output
    fused = jnp.dot(wh_ref[...], h2.astype(jnp.bfloat16),
                    preferred_element_type=jnp.float32) + bh_ref[...]

    # clamp only the log_std rows (row >= action_dim); mean rows untouched.
    row = jax.lax.broadcasted_iota(jnp.int32, fused.shape, dimension=0)
    clamped = jnp.clip(fused, LOG_STD_MIN, LOG_STD_MAX)
    out_ref[...] = jnp.where(row < action_dim, fused, clamped).astype(out_ref.dtype)


def actor_forward(x, params, action_dim):
    """x: (B, ...) -> (mean (B, A), log_std (B, A)). Flatten/transpose/pad is glue."""
    w1, b1, w2, b2, wh, bh = params
    B = x.shape[0]
    x2d = jnp.asarray(x, jnp.float32).reshape(B, -1)
    F = x2d.shape[1]
    Fp = w1.shape[1]           # feature dim padded to a multiple of 8 at init
    n_head = wh.shape[0]       # 2*action_dim padded to a multiple of 8

    # Batch tile: multiple of 128 (lane axis), sized from B so padding stays
    # small; force >=2 grid steps when B permits so v7x can use both TCs.
    n_steps = max(pl.cdiv(B, MAX_TB), 2 if B > LANE else 1)
    TB = _round_up(pl.cdiv(B, n_steps), LANE)
    Bp = n_steps * TB

    # Batch onto the lane axis: (B, F) -> (Fp, Bp).  Cheap XLA plumbing that
    # buys fully lane-dense, contiguous kernel streams.
    xt = jnp.pad(x2d.T, ((0, Fp - F), (0, Bp - B)))

    # Weights/biases: whole-array blocks, constant index_map -> VMEM-resident.
    resident = lambda a: pl.BlockSpec(a.shape, lambda i: (0,) * a.ndim)

    out = pl.pallas_call(
        functools.partial(actor_forward_kernel, action_dim=action_dim),
        out_shape=jax.ShapeDtypeStruct((n_head, Bp), jnp.float32),
        grid=(n_steps,),
        in_specs=[
            pl.BlockSpec((Fp, TB), lambda i: (0, i)),   # x streams over batch
            resident(w1), resident(b1),
            resident(w2), resident(b2),
            resident(wh), resident(bh),
        ],
        out_specs=pl.BlockSpec((n_head, TB), lambda i: (0, i)),
        compiler_params=pltpu.CompilerParams(
            dimension_semantics=("parallel",)),         # v7x: shard across 2 TCs
    )(xt, w1, b1, w2, b2, wh, bh)

    # NOTE: padded batch columns [B, Bp) of `out` contain relu(bias)-propagated
    # garbage; they are sliced off here and must never be consumed raw.
    mean = out[:action_dim, :B].T
    log_std = out[action_dim:2 * action_dim, :B].T
    return mean, log_std


def init_actor_params(key, input_shape, output_shape, hidden_size):
    """Deterministic init mimicking nn.Linear (uniform +/- 1/sqrt(fan_in)).
    Weights kept in PyTorch (out, in) orientation, bf16; mean|logstd heads
    fused row-wise and padded to a multiple of 8 sublanes; input dim padded
    to a multiple of 8."""
    keys = jax.random.split(key, 8)

    def linear(kw, kb, fan_in, fan_out):
        bound = 1.0 / float(fan_in) ** 0.5
        w = jax.random.uniform(kw, (fan_out, fan_in), jnp.float32, -bound, bound)
        b = jax.random.uniform(kb, (fan_out, 1), jnp.float32, -bound, bound)
        return w, b

    w1, b1 = linear(keys[0], keys[1], input_shape, hidden_size)
    w2, b2 = linear(keys[2], keys[3], hidden_size, hidden_size)
    wm, bm = linear(keys[4], keys[5], hidden_size, output_shape)
    wl, bl = linear(keys[6], keys[7], hidden_size, output_shape)

    # Pad the input-feature dim to a multiple of 8 (sublane-friendly x tile).
    Fp = _round_up(input_shape, 8)
    w1p = jnp.zeros((hidden_size, Fp), jnp.float32).at[:, :input_shape].set(w1)

    # Fuse the two heads (mean | log_std) along rows; pad rows to a multiple
    # of 8 so the fused output block is a legal f32 sublane tile.
    n_head = _round_up(2 * output_shape, 8)
    wh = jnp.zeros((n_head, hidden_size), jnp.float32)
    wh = wh.at[:output_shape].set(wm).at[output_shape:2 * output_shape].set(wl)
    bh = jnp.zeros((n_head, 1), jnp.float32)
    bh = bh.at[:output_shape].set(bm).at[output_shape:2 * output_shape].set(bl)

    # bf16 weights (MXU-native, half the DMA bytes), f32 biases.
    return (w1p.astype(jnp.bfloat16), b1,
            w2.astype(jnp.bfloat16), b2,
            wh.astype(jnp.bfloat16), bh)


def ref_forward(x, params, action_dim):
    """Pure-JAX reference doing the same bf16-operand / f32-accumulate math."""
    w1, b1, w2, b2, wh, bh = params
    B = x.shape[0]
    xf = jnp.asarray(x, jnp.float32).reshape(B, -1)
    Fp = w1.shape[1]
    xf = jnp.pad(xf, ((0, 0), (0, Fp - xf.shape[1])))
    h1 = jnp.maximum(jnp.dot(xf.astype(jnp.bfloat16), w1.T,
                             preferred_element_type=jnp.float32) + b1[:, 0], 0.0)
    h2 = jnp.maximum(jnp.dot(h1.astype(jnp.bfloat16), w2.T,
                             preferred_element_type=jnp.float32) + b2[:, 0], 0.0)
    fused = jnp.dot(h2.astype(jnp.bfloat16), wh.T,
                    preferred_element_type=jnp.float32) + bh[:, 0]
    mean = fused[:, :action_dim]
    log_std = jnp.clip(fused[:, action_dim:2 * action_dim],
                       LOG_STD_MIN, LOG_STD_MAX)
    return mean, log_std


if __name__ == "__main__":
    # Small shapes consistent with the module: obs (B, 4, 4) flattened to 16,
    # hidden=32, action dim=4.
    OBS_H, OBS_W = 4, 4
    INPUT_SHAPE = OBS_H * OBS_W
    OUTPUT_SHAPE = 4
    HIDDEN = 32

    key = jax.random.PRNGKey(0)
    kx, kx2, kp = jax.random.split(key, 3)
    params = init_actor_params(kp, INPUT_SHAPE, OUTPUT_SHAPE, HIDDEN)

    def check(xin):
        mean, log_std = actor_forward(xin, params, OUTPUT_SHAPE)
        jax.block_until_ready((mean, log_std))
        mean_ref, logstd_ref = ref_forward(xin, params, OUTPUT_SHAPE)
        assert mean.shape == (xin.shape[0], OUTPUT_SHAPE)
        assert log_std.shape == (xin.shape[0], OUTPUT_SHAPE)
        assert jnp.allclose(mean, mean_ref, atol=2e-4), "mean mismatch"
        assert jnp.allclose(log_std, logstd_ref, atol=2e-4), "log_std mismatch"
        assert bool(jnp.all(log_std <= LOG_STD_MAX))
        assert bool(jnp.all(log_std >= LOG_STD_MIN))

    # Single-tile case (B=8) and a multi-step / ragged-batch case (B=300,
    # exercises lane padding, >=2 grid steps and the wrapper slicing).
    check(jax.random.normal(kx, (8, OBS_H, OBS_W), jnp.float32))
    check(jax.random.normal(kx2, (300, OBS_H, OBS_W), jnp.float32))

    # TODO(synk): get_action (tanh-squashed Normal rsample + log_prob) is
    # sampling glue outside forward(); left to jax.random in the host program.
    print("KERNEL_OK")
</pallas_src>

<mosaic_0001>
module attributes {stable_mosaic.version = 11 : i64} {
  func.func @actor_forward_kernel(%arg0: i32, %arg1: memref<16x128xf32, #tpu.memory_space<vmem>>, %arg2: memref<32x16xbf16, #tpu.memory_space<vmem>>, %arg3: memref<32x1xf32, #tpu.memory_space<vmem>>, %arg4: memref<32x32xbf16, #tpu.memory_space<vmem>>, %arg5: memref<32x1xf32, #tpu.memory_space<vmem>>, %arg6: memref<8x32xbf16, #tpu.memory_space<vmem>>, %arg7: memref<8x1xf32, #tpu.memory_space<vmem>>, %arg8: memref<8x128xf32, #tpu.memory_space<vmem>>) attributes {dimension_semantics = [#tpu.dimension_semantics<parallel>], iteration_bounds = array<i64: 1>, scalar_prefetch = 0 : i64, scratch_operands = 0 : i64, tpu.core_type = #tpu.core_type<tc>, window_params = [{transform_indices = @transform_0, window_bounds = array<i64: 16, 128>}, {pipeline_mode = #tpu.pipeline_mode<synchronous>, transform_indices = @transform_1, window_bounds = array<i64: 32, 16>}, {pipeline_mode = #tpu.pipeline_mode<synchronous>, transform_indices = @transform_2, window_bounds = array<i64: 32, 1>}, {pipeline_mode = #tpu.pipeline_mode<synchronous>, transform_indices = @transform_3, window_bounds = array<i64: 32, 32>}, {pipeline_mode = #tpu.pipeline_mode<synchronous>, transform_indices = @transform_4, window_bounds = array<i64: 32, 1>}, {pipeline_mode = #tpu.pipeline_mode<synchronous>, transform_indices = @transform_5, window_bounds = array<i64: 8, 32>}, {pipeline_mode = #tpu.pipeline_mode<synchronous>, transform_indices = @transform_6, window_bounds = array<i64: 8, 1>}, {transform_indices = @transform_7, window_bounds = array<i64: 8, 128>}]} {
    %c0 = arith.constant 0 : index
    %c0_0 = arith.constant 0 : index
    %0 = vector.load %arg1[%c0, %c0_0] : memref<16x128xf32, #tpu.memory_space<vmem>>, vector<16x128xf32>
    %1 = arith.truncf %0 : vector<16x128xf32> to vector<16x128xbf16>
    %c0_1 = arith.constant 0 : index
    %c0_2 = arith.constant 0 : index
    %2 = vector.load %arg2[%c0_1, %c0_2] : memref<32x16xbf16, #tpu.memory_space<vmem>>, vector<32x16xbf16>
    %cst = arith.constant dense<0.000000e+00> : vector<32x128xf32>
    %3 = tpu.matmul %2, %1, %cst {dimension_numbers = #tpu.dot_dimension_numbers<[1], [0], [0], [1], [0, 0, 1, 1], [], []>} : vector<32x16xbf16>, vector<16x128xbf16>, vector<32x128xf32> -> vector<32x128xf32>
    %c0_3 = arith.constant 0 : index
    %c0_4 = arith.constant 0 : index
    %4 = vector.load %arg3[%c0_3, %c0_4] : memref<32x1xf32, #tpu.memory_space<vmem>>, vector<32x1xf32>
    %5 = vector.broadcast %4 : vector<32x1xf32> to vector<32x128xf32>
    %6 = arith.addf %3, %5 : vector<32x128xf32>
    %cst_5 = arith.constant 0.000000e+00 : f32
    %7 = vector.broadcast %cst_5 : f32 to vector<32x128xf32>
    %8 = arith.maximumf %6, %7 : vector<32x128xf32>
    %c0_6 = arith.constant 0 : index
    %c0_7 = arith.constant 0 : index
    %9 = vector.load %arg4[%c0_6, %c0_7] : memref<32x32xbf16, #tpu.memory_space<vmem>>, vector<32x32xbf16>
    %10 = arith.truncf %8 : vector<32x128xf32> to vector<32x128xbf16>
    %cst_8 = arith.constant dense<0.000000e+00> : vector<32x128xf32>
    %11 = tpu.matmul %9, %10, %cst_8 {dimension_numbers = #tpu.dot_dimension_numbers<[1], [0], [0], [1], [0, 0, 1, 1], [], []>} : vector<32x32xbf16>, vector<32x128xbf16>, vector<32x128xf32> -> vector<32x128xf32>
    %c0_9 = arith.constant 0 : index
    %c0_10 = arith.constant 0 : index
    %12 = vector.load %arg5[%c0_9, %c0_10] : memref<32x1xf32, #tpu.memory_space<vmem>>, vector<32x1xf32>
    %13 = vector.broadcast %12 : vector<32x1xf32> to vector<32x128xf32>
    %14 = arith.addf %11, %13 : vector<32x128xf32>
    %cst_11 = arith.constant 0.000000e+00 : f32
    %15 = vector.broadcast %cst_11 : f32 to vector<32x128xf32>
    %16 = arith.maximumf %14, %15 : vector<32x128xf32>
    %c0_12 = arith.constant 0 : index
    %c0_13 = arith.constant 0 : index
    %17 = vector.load %arg6[%c0_12, %c0_13] : memref<8x32xbf16, #tpu.memory_space<vmem>>, vector<8x32xbf16>
    %18 = arith.truncf %16 : vector<32x128xf32> to vector<32x128xbf16>
    %cst_14 = arith.constant dense<0.000000e+00> : vector<8x128xf32>
    %19 = tpu.matmul %17, %18, %cst_14 {dimension_numbers = #tpu.dot_dimension_numbers<[1], [0], [0], [1], [0, 0, 1, 1], [], []>} : vector<8x32xbf16>, vector<32x128xbf16>, vector<8x128xf32> -> vector<8x128xf32>
    %c0_15 = arith.constant 0 : index
    %c0_16 = arith.constant 0 : index
    %20 = vector.load %arg7[%c0_15, %c0_16] : memref<8x1xf32, #tpu.memory_space<vmem>>, vector<8x1xf32>
    %21 = vector.broadcast %20 : vector<8x1xf32> to vector<8x128xf32>
    %22 = arith.addf %19, %21 : vector<8x128xf32>
    %23 = tpu.iota {dimensions = array<i32: 0>} : vector<8x128xi32>
    %cst_17 = arith.constant -2.000000e+01 : f32
    %cst_18 = arith.constant 2.000000e+00 : f32
    %24 = vector.broadcast %cst_17 : f32 to vector<8x128xf32>
    %25 = arith.maximumf %24, %22 : vector<8x128xf32>
    %26 = vector.broadcast %cst_18 : f32 to vector<8x128xf32>
    %27 = arith.minimumf %26, %25 : vector<8x128xf32>
    %c4_i32 = arith.constant 4 : i32
    %28 = vector.broadcast %c4_i32 : i32 to vector<8x128xi32>
    %29 = arith.cmpi slt, %23, %28 : vector<8x128xi32>
    %30 = arith.select %29, %22, %27 : vector<8x128xi1>, vector<8x128xf32>
    %c0_19 = arith.constant 0 : index
    %c0_20 = arith.constant 0 : index
    %31 = vector.load %arg8[%c0_19, %c0_20] : memref<8x128xf32, #tpu.memory_space<vmem>>, vector<8x128xf32>
    tpu.vector_store %arg8[%c0_19, %c0_20], %30 {strides = array<i32>} : memref<8x128xf32, #tpu.memory_space<vmem>>, vector<8x128xf32>,
    return
  }
  func.func @transform_0(%arg0: i32) -> (i32, i32) {
    %c0_i32 = arith.constant 0 : i32
    %c0_i32_0 = arith.constant 0 : i32
    return %c0_i32, %arg0 : i32, i32
  }
  func.func @transform_1(%arg0: i32) -> (i32, i32) {
    %c0_i32 = arith.constant 0 : i32
    %c0_i32_0 = arith.constant 0 : i32
    %c0_i32_1 = arith.constant 0 : i32
    return %c0_i32, %c0_i32_0 : i32, i32
  }
  func.func @transform_2(%arg0: i32) -> (i32, i32) {
    %c0_i32 = arith.constant 0 : i32
    %c0_i32_0 = arith.constant 0 : i32
    %c0_i32_1 = arith.constant 0 : i32
    return %c0_i32, %c0_i32_0 : i32, i32
  }
  func.func @transform_3(%arg0: i32) -> (i32, i32) {
    %c0_i32 = arith.constant 0 : i32
    %c0_i32_0 = arith.constant 0 : i32
    %c0_i32_1 = arith.constant 0 : i32
    return %c0_i32, %c0_i32_0 : i32, i32
  }
  func.func @transform_4(%arg0: i32) -> (i32, i32) {
    %c0_i32 = arith.constant 0 : i32
    %c0_i32_0 = arith.constant 0 : i32
    %c0_i32_1 = arith.constant 0 : i32
    return %c0_i32, %c0_i32_0 : i32, i32
  }
  func.func @transform_5(%arg0: i32) -> (i32, i32) {
    %c0_i32 = arith.constant 0 : i32
    %c0_i32_0 = arith.constant 0 : i32
    %c0_i32_1 = arith.constant 0 : i32
    return %c0_i32, %c0_i32_0 : i32, i32
  }
  func.func @transform_6(%arg0: i32) -> (i32, i32) {
    %c0_i32 = arith.constant 0 : i32
    %c0_i32_0 = arith.constant 0 : i32
    %c0_i32_1 = arith.constant 0 : i32
    return %c0_i32, %c0_i32_0 : i32, i32
  }
  func.func @transform_7(%arg0: i32) -> (i32, i32) {
    %c0_i32 = arith.constant 0 : i32
    %c0_i32_0 = arith.constant 0 : i32
    return %c0_i32, %arg0 : i32, i32
  }
}

</mosaic_0001>

<llo_original>
// kernel: tpu_custom_call.1
$region0: #{tpu_custom_call.1}
  #allocation0 [shape = 'u32[]', space=smem, size = 0x4, offset = 0x4, fixed_abs, tag = 'smem constant byte address 0x4 - core index']
  #allocation1 [shape = 'u32[144,128]{1,0:T(1,128)}', space=vmem, size = 0x12000, scoped, tag = 'internal scratch']
  %s0 = inlined_call_operand.vmem [shape: f32[16,128], index: 0, kind: input, shape index: {}]
  %s1 = inlined_call_operand.vmem [shape: bf16[32,16], index: 1, kind: input, shape index: {}]
  %s2 = inlined_call_operand.vmem [shape: f32[32,1], index: 2, kind: input, shape index: {}]
  %s3 = inlined_call_operand.vmem [shape: bf16[32,32], index: 3, kind: input, shape index: {}]
  %s4 = inlined_call_operand.vmem [shape: f32[32,1], index: 4, kind: input, shape index: {}]
  %s5 = inlined_call_operand.vmem [shape: bf16[8,32], index: 5, kind: input, shape index: {}]
  %s6 = inlined_call_operand.vmem [shape: f32[8,1], index: 6, kind: input, shape index: {}]
  %s7 = inlined_call_operand.hbm [shape: f32[8,128], index: 7, kind: output, shape index: {}]
  %s8 = sld [smem:[#allocation0]]
  $region38: #{tpu_custom_call.1} parent=0
    _
  %s10 = ssub.s32 1, %s8
  %s11 = scalar_select 0, %s10, %s8
  $region1: #{tpu_custom_call.1} parent=0
    #allocation2 [shape = 'u8[4096]{0}', space=vmem, size = 0x1000, scoped, tag = 'output window, operand 0, single buffered']
    #allocation3 [shape = 's32[1]{0}', space=sflag, size = 0x4, scoped, tag = 'scoped memory for tpu_custom_call.1']
    %12 = vsyncpa [#allocation3], 0
    // Predicated region
    $region2: #{tpu_custom_call.1} parent=1 // pred_check
      _
    $region3: #{tpu_custom_call.1} parent=1 // pred_check_branch
      %14 = sbr.rel (0) target = $region5
    $region4: #{tpu_custom_call.1} parent=1 // pred_region
      _
    $region5: #{tpu_custom_call.1} parent=1 // pred_fallthru
      _
    // Predicated region
    $region6: #{tpu_custom_call.1} parent=1 // pred_check
      _
    $region7: #{tpu_custom_call.1} parent=1 // pred_check_branch
      %16 = sbr.rel (0) target = $region9
    $region8: #{tpu_custom_call.1} parent=1 // pred_region
      _
    $region9: #{tpu_custom_call.1} parent=1 // pred_fallthru
      _
    // Predicated region
    $region10: #{tpu_custom_call.1} parent=1 // pred_check
      _
    $region11: #{tpu_custom_call.1} parent=1 // pred_check_branch
      %18 = sbr.rel (0) target = $region13
    $region12: #{tpu_custom_call.1} parent=1 // pred_region
      _
    $region13: #{tpu_custom_call.1} parent=1 // pred_fallthru
      _
    // Predicated region
    $region14: #{tpu_custom_call.1} parent=1 // pred_check
      _
    $region15: #{tpu_custom_call.1} parent=1 // pred_check_branch
      %20 = sbr.rel (0) target = $region17
    $region16: #{tpu_custom_call.1} parent=1 // pred_region
      _
    $region17: #{tpu_custom_call.1} parent=1 // pred_fallthru
      _
    // Predicated region
    $region18: #{tpu_custom_call.1} parent=1 // pred_check
      _
    $region19: #{tpu_custom_call.1} parent=1 // pred_check_branch
      %22 = sbr.rel (0) target = $region21
    $region20: #{tpu_custom_call.1} parent=1 // pred_region
      _
    $region21: #{tpu_custom_call.1} parent=1 // pred_fallthru
      _
    // Predicated region
    $region22: #{tpu_custom_call.1} parent=1 // pred_check
      _
    $region23: #{tpu_custom_call.1} parent=1 // pred_check_branch
      %24 = sbr.rel (0) target = $region25
    $region24: #{tpu_custom_call.1} parent=1 // pred_region
      _
    $region25: #{tpu_custom_call.1} parent=1 // pred_fallthru
      _
    // Predicated region
    $region26: #{tpu_custom_call.1} parent=1 // pred_check
      _
    $region27: #{tpu_custom_call.1} parent=1 // pred_check_branch
      %26 = sbr.rel (0) target = $region29
    $region28: #{tpu_custom_call.1} parent=1 // pred_region
      _
    $region29: #{tpu_custom_call.1} parent=1 // pred_fallthru
      _
    %v28 = vld [vmem:[%s0] sm:$0xff]
    %v29 = vld [vmem:[%s0 + $0x8] sm:$0xff]
    %v30 = vpack.c.bf16 %v29, %v28
    %v31 = vld [vmem:[%s1] sm:$0xf]
    %v32 = vld [vmem:[%s1 + $0x4] sm:$0xf]
    %v33 = vld [vmem:[%s1 + $0x8] sm:$0xf]
    %v34 = vld [vmem:[%s1 + $0xc] sm:$0xf]
    %v35 = vld [vmem:[%s2] sm:$0xff]
    %v36 = vld [vmem:[%s2 + $0x8] sm:$0xff]
    %v37 = vld [vmem:[%s2 + $0x10] sm:$0xff]
    %v38 = vld [vmem:[%s2 + $0x18] sm:$0xff]
    %40 = vset.pattern.permute.xlu0 0
    %41 = vperm.xlu0 %40, %v35
    %v42 = vpop.permute.xlu0 %41
    %45 = vset.pattern.permute.xlu0 0
    %46 = vperm.xlu0 %45, %v36
    %v47 = vpop.permute.xlu0 %46
    %50 = vset.pattern.permute.xlu0 0
    %51 = vperm.xlu0 %50, %v37
    %v52 = vpop.permute.xlu0 %51
    %55 = vset.pattern.permute.xlu0 0
    %56 = vperm.xlu0 %55, %v38
    %v57 = vpop.permute.xlu0 %56
    %v63 = vunpack.c.l.b16 %v31
    %v64 = vunpack.c.l.b16 %v32
    %v65 = vunpack.c.l.b16 %v33
    %v66 = vunpack.c.l.b16 %v34
    %v67 = vpack.c.b16 %v64, %v63
    %v68 = vpack.c.b16 %v66, %v65
    %vm69 = vcmask 130048
    %v71 = vsel %vm69, %v67, 0
    %v74 = vsel %vm69, %v68, 0
    %76 = vmatprep.subr.bf16.mxu0 0
    %77 = vmatpush1.bf16.msra.mxu0 0
    %78 = vmatprep.subr.bf16.mxu0 0
    %79 = vmatpush1.bf16.msra.mxu0 0
    %80 = vmatprep.subr.bf16.mxu0 0
    %81 = vmatpush1.bf16.msra.mxu0 0
    %82 = vmatprep.subr.bf16.mxu0 0
    %83 = vmatpush1.bf16.msra.mxu0 0
    %84 = vmatprep.subr.bf16.mxu0 0
    %85 = vmatpush1.bf16.msra.mxu0 0
    %86 = vmatprep.subr.bf16.mxu0 0
    %87 = vmatpush1.bf16.msra.mxu0 0
    %88 = vmatprep.subr.bf16.mxu0 0
    %89 = vmatpush1.bf16.msra.mxu0 0
    %90 = vmatprep.subr.bf16.mxu0 0
    %91 = vmatpush1.bf16.msra.mxu0 %v30
    %92 = vmatprep.subr.bf16.mxu0 0
    %93 = vmatpush2.bf16.msra.mxu0 0
    %94 = vmatprep.subr.bf16.mxu0 0
    %95 = vmatpush2.bf16.msra.mxu0 0
    %96 = vmatprep.subr.bf16.mxu0 0
    %97 = vmatpush2.bf16.msra.mxu0 0
    %98 = vmatprep.subr.bf16.mxu0 0
    %99 = vmatpush2.bf16.msra.mxu0 0
    %100 = vmatprep.subr.bf16.mxu0 0
    %101 = vmatpush2.bf16.msra.mxu0 0
    %102 = vmatprep.subr.bf16.mxu0 0
    %103 = vmatpush2.bf16.msra.mxu0 0
    %104 = vmatprep.subr.bf16.mxu0 0
    %105 = vmatpush2.bf16.msra.mxu0 0
    %106 = vmatprep.subr.bf16.mxu0 0
    %107 = vmatpush2.bf16.msra.mxu0 0
    %108 = vmatprep.mubr.bf16.mxu0 0
    %109 = vmatmul.mubr.bf16.gmra.mxu0 %v71
    %v110 = vpop.f32.mrf.mxu0
    %v111 = vadd.f32 %v42, %v110
    %v112 = vpop.f32.mrf.mxu0
    %v113 = vpop.f32.mrf.mxu0
    %v114 = vadd.f32 %v47, %v113
    %v115 = vpop.f32.mrf.mxu0
    %116 = vmatprep.mubr.bf16.mxu0 0
    %117 = vmatmul.mubr.bf16.gmra.mxu0 %v74
    %v118 = vpop.f32.mrf.mxu0
    %v119 = vadd.f32 %v52, %v118
    %v120 = vpop.f32.mrf.mxu0
    %v121 = vpop.f32.mrf.mxu0
    %v122 = vadd.f32 %v57, %v121
    %v123 = vpop.f32.mrf.mxu0
    %124 = vdwg.mxu0
    %v125 = vmax.f32 %v111, 0.0
    %v126 = vmax.f32 %v114, 0.0
    %v127 = vmax.f32 %v119, 0.0
    %v128 = vmax.f32 %v122, 0.0
    %v129 = vld [vmem:[%s3] sm:$0xf]
    %v130 = vld [vmem:[%s3 + $0x4] sm:$0xf]
    %v131 = vld [vmem:[%s3 + $0x8] sm:$0xf]
    %v132 = vld [vmem:[%s3 + $0xc] sm:$0xf]
    %v133 = vpack.c.bf16 %v126, %v125
    %v134 = vpack.c.bf16 %v128, %v127
    %v135 = vld [vmem:[%s4] sm:$0xff]
    %v136 = vld [vmem:[%s4 + $0x8] sm:$0xff]
    %v137 = vld [vmem:[%s4 + $0x10] sm:$0xff]
    %v138 = vld [vmem:[%s4 + $0x18] sm:$0xff]
    %140 = vset.pattern.permute.xlu0 0
    %141 = vperm.xlu0 %140, %v135
    %v142 = vpop.permute.xlu0 %141
    %145 = vset.pattern.permute.xlu0 0
    %146 = vperm.xlu0 %145, %v136
    %v147 = vpop.permute.xlu0 %146
    %150 = vset.pattern.permute.xlu0 0
    %151 = vperm.xlu0 %150, %v137
    %v152 = vpop.permute.xlu0 %151
    %155 = vset.pattern.permute.xlu0 0
    %156 = vperm.xlu0 %155, %v138
    %v157 = vpop.permute.xlu0 %156
    %v163 = vunpack.c.l.b16 %v129
    %v164 = vunpack.c.l.b16 %v130
    %v165 = vunpack.c.l.b16 %v131
    %v166 = vunpack.c.l.b16 %v132
    %v167 = vpack.c.b16 %v164, %v163
    %v168 = vpack.c.b16 %v166, %v165
    %vm169 = vcmask 261120
    %v171 = vsel %vm169, %v167, 0
    %v174 = vsel %vm169, %v168, 0
    %176 = vmatprep.subr.bf16.mxu0 0
    %177 = vmatpush1.bf16.msra.mxu0 0
    %178 = vmatprep.subr.bf16.mxu0 0
    %179 = vmatpush1.bf16.msra.mxu0 0
    %180 = vmatprep.subr.bf16.mxu0 0
    %181 = vmatpush1.bf16.msra.mxu0 0
    %182 = vmatprep.subr.bf16.mxu0 0
    %183 = vmatpush1.bf16.msra.mxu0 0
    %184 = vmatprep.subr.bf16.mxu0 0
    %185 = vmatpush1.bf16.msra.mxu0 0
    %186 = vmatprep.subr.bf16.mxu0 0
    %187 = vmatpush1.bf16.msra.mxu0 0
    %188 = vmatprep.subr.bf16.mxu0 0
    %189 = vmatpush1.bf16.msra.mxu0 %v134
    %190 = vmatprep.subr.bf16.mxu0 0
    %191 = vmatpush1.bf16.msra.mxu0 %v133
    %192 = vmatprep.subr.bf16.mxu0 0
    %193 = vmatpush2.bf16.msra.mxu0 0
    %194 = vmatprep.subr.bf16.mxu0 0
    %195 = vmatpush2.bf16.msra.mxu0 0
    %196 = vmatprep.subr.bf16.mxu0 0
    %197 = vmatpush2.bf16.msra.mxu0 0
    %198 = vmatprep.subr.bf16.mxu0 0
    %199 = vmatpush2.bf16.msra.mxu0 0
    %200 = vmatprep.subr.bf16.mxu0 0
    %201 = vmatpush2.bf16.msra.mxu0 0
    %202 = vmatprep.subr.bf16.mxu0 0
    %203 = vmatpush2.bf16.msra.mxu0 0
    %204 = vmatprep.subr.bf16.mxu0 0
    %205 = vmatpush2.bf16.msra.mxu0 0
    %206 = vmatprep.subr.bf16.mxu0 0
    %207 = vmatpush2.bf16.msra.mxu0 0
    %208 = vmatprep.mubr.bf16.mxu0 0
    %209 = vmatmul.mubr.bf16.gmra.mxu0 %v171
    %v210 = vpop.f32.mrf.mxu0
    %v211 = vadd.f32 %v142, %v210
    %v212 = vpop.f32.mrf.mxu0
    %v213 = vpop.f32.mrf.mxu0
    %v214 = vadd.f32 %v147, %v213
    %v215 = vpop.f32.mrf.mxu0
    %216 = vmatprep.mubr.bf16.mxu0 0
    %217 = vmatmul.mubr.bf16.gmra.mxu0 %v174
    %v218 = vpop.f32.mrf.mxu0
    %v219 = vadd.f32 %v152, %v218
    %v220 = vpop.f32.mrf.mxu0
    %v221 = vpop.f32.mrf.mxu0
    %v222 = vadd.f32 %v157, %v221
    %v223 = vpop.f32.mrf.mxu0
    %224 = vdwg.mxu0
    %v225 = vmax.f32 %v211, 0.0
    %v226 = vmax.f32 %v214, 0.0
    %v227 = vmax.f32 %v219, 0.0
    %v228 = vmax.f32 %v222, 0.0
    %v229 = vld [vmem:[%s5] sm:$0xf]
    %v230 = vpack.c.bf16 %v226, %v225
    %v231 = vpack.c.bf16 %v228, %v227
    %v232 = vld [vmem:[%s6] sm:$0xff]
    %234 = vset.pattern.permute.xlu0 0
    %235 = vperm.xlu0 %234, %v232
    %v236 = vpop.permute.xlu0 %235
    %v239 = vsel %vm169, %v229, 0
    %241 = vmatprep.subr.bf16.mxu0 0
    %242 = vmatpush1.bf16.msra.mxu0 0
    %243 = vmatprep.subr.bf16.mxu0 0
    %244 = vmatpush1.bf16.msra.mxu0 0
    %245 = vmatprep.subr.bf16.mxu0 0
    %246 = vmatpush1.bf16.msra.mxu0 0
    %247 = vmatprep.subr.bf16.mxu0 0
    %248 = vmatpush1.bf16.msra.mxu0 0
    %249 = vmatprep.subr.bf16.mxu0 0
    %250 = vmatpush1.bf16.msra.mxu0 0
    %251 = vmatprep.subr.bf16.mxu0 0
    %252 = vmatpush1.bf16.msra.mxu0 0
    %253 = vmatprep.subr.bf16.mxu0 0
    %254 = vmatpush1.bf16.msra.mxu0 %v231
    %255 = vmatprep.subr.bf16.mxu0 0
    %256 = vmatpush1.bf16.msra.mxu0 %v230
    %257 = vmatprep.subr.bf16.mxu0 0
    %258 = vmatpush2.bf16.msra.mxu0 0
    %259 = vmatprep.subr.bf16.mxu0 0
    %260 = vmatpush2.bf16.msra.mxu0 0
    %261 = vmatprep.subr.bf16.mxu0 0
    %262 = vmatpush2.bf16.msra.mxu0 0
    %263 = vmatprep.subr.bf16.mxu0 0
    %264 = vmatpush2.bf16.msra.mxu0 0
    %265 = vmatprep.subr.bf16.mxu0 0
    %266 = vmatpush2.bf16.msra.mxu0 0
    %267 = vmatprep.subr.bf16.mxu0 0
    %268 = vmatpush2.bf16.msra.mxu0 0
    %269 = vmatprep.subr.bf16.mxu0 0
    %270 = vmatpush2.bf16.msra.mxu0 0
    %271 = vmatprep.subr.bf16.mxu0 0
    %272 = vmatpush2.bf16.msra.mxu0 0
    %273 = vmatprep.mubr.bf16.mxu0 0
    %274 = vmatmul.mubr.bf16.gmra.mxu0 %v239
    %v275 = vpop.f32.mrf.mxu0
    %v276 = vadd.f32 %v236, %v275
    %v277 = vpop.f32.mrf.mxu0
    %v278 = vpop.f32.mrf.mxu0
    %v279 = vpop.f32.mrf.mxu0
    %280 = vdwg.mxu0
    %v281 = vlaneseq
    %v282 = vshrl.u32 %v281, 7
    %v283 = vmax.f32 %v276, -20.0
    %v284 = vmin.f32 %v283, 2.0
    %vm285 = vcmp.lt.s32.totalorder %v282, 4
    %v286 = vsel %vm285, %v276, %v284
    %287 = vst [vmem:[#allocation2] sm:$0xff] %v286
    // Predicated region
    $region30: #{tpu_custom_call.1} parent=1 // pred_check
      _
    $region31: #{tpu_custom_call.1} parent=1 // pred_check_branch
      %289 = sbr.rel (0) target = $region33
    $region32: #{tpu_custom_call.1} parent=1 // pred_region
      %s291 = ssub.s32 128, 128
      %292 = vsyncadd [#allocation3], %s291
      %s294 = sshll.u32 [#allocation2], 4
      %s295 = int_to_ptr.vmem [resolvable:$true] %s294
      %297 = dma.vmem_to_hbm [thread:$0]  %s295, 128, %s7, [#allocation3]
    $region33: #{tpu_custom_call.1} parent=1 // pred_fallthru
      _
    // Predicated region
    $region34: #{tpu_custom_call.1} parent=1 // pred_check
      _
    $region35: #{tpu_custom_call.1} parent=1 // pred_check_branch
      %299 = sbr.rel (0) target = $region37
    $region36: #{tpu_custom_call.1} parent=1 // pred_region
      %300 = dma.done [#allocation3], 128
    $region37: #{tpu_custom_call.1} parent=1 // pred_fallthru
      _
    %301 = vsyncpa [#allocation3], 1

</llo_original>
